<compile_context>
chip_gen: v6e
topology: v6e:2x2x1
jax: 0.10.0
libtpu: 0.0.40
codegen_flags: <defaults>
</compile_context>

<pallas_src>
import functools

import jax
import jax.numpy as jnp
from jax.experimental import pallas as pl
from jax.experimental.pallas import tpu as pltpu

LN_EPS = 1e-5
LANE = 128
SUBLANE = 8


def _round_up(x, m):
    return (x + m - 1) // m * m


def _default_block_rows(batch):
    """Row-tile heuristic: multiple of 8, >=2 grid steps when possible, cap 256."""
    b8 = _round_up(max(batch, 1), SUBLANE)
    if b8 >= 512:
        return 256
    if b8 >= 2 * SUBLANE:
        return max(SUBLANE, (b8 // 2) // SUBLANE * SUBLANE)
    return SUBLANE


def residual_block_kernel(x_ref,
                          w1_ref, b1_ref, g1_ref, be1_ref,
                          w2_ref, b2_ref, g2_ref, be2_ref,
                          ws_ref, bs_ref,
                          o_ref, *, out_features):
    out_pad = o_ref.shape[-1]
    inv_n = 1.0 / float(out_features)
    # Valid-lane mask for LayerNorm over the *logical* out_features.
    lane_mask = jax.lax.broadcasted_iota(jnp.int32, (1, out_pad), 1) < out_features

    # Hoist the (1, out_pad) parameter rows once per tile (f32, VPU side).
    b1 = b1_ref[...]; g1 = g1_ref[...]; be1 = be1_ref[...]
    b2 = b2_ref[...]; g2 = g2_ref[...]; be2 = be2_ref[...]
    bs = bs_ref[...]

    def layernorm(h, gamma, beta):
        # Padded lanes of h are exactly 0 (zero-padded weights/biases), so the
        # plain sum / out_features gives the correct mean; variance is masked.
        mu = jnp.sum(h, axis=-1, keepdims=True) * inv_n
        d = h - mu
        var = jnp.sum(jnp.where(lane_mask, d * d, 0.0),
                      axis=-1, keepdims=True) * inv_n
        return d * jax.lax.rsqrt(var + LN_EPS) * gamma + beta

    # bf16 at the MXU boundary only; f32 accumulation.
    xb = x_ref[...].astype(jnp.bfloat16)

    # Shortcut projection issued early so x's live range ends here.
    ident = jnp.dot(xb, ws_ref[...], preferred_element_type=jnp.float32) + bs
    h = jnp.dot(xb, w1_ref[...], preferred_element_type=jnp.float32) + b1

    h = jnp.maximum(layernorm(h, g1, be1), 0.0)
    # dropout(p=0.6): identity in eval mode.
    h = jnp.dot(h.astype(jnp.bfloat16), w2_ref[...],
                preferred_element_type=jnp.float32) + b2
    h = layernorm(h, g2, be2)

    o_ref[...] = jnp.maximum(h + ident, 0.0).astype(o_ref.dtype)


def _pad2(a, rows, cols, dtype):
    a = jnp.asarray(a, dtype)
    return jnp.pad(a, ((0, rows - a.shape[0]), (0, cols - a.shape[1])))


def residual_block(x, params, *, block_rows=None):
    """x: (B, in_features) float32. params: dict from init_params."""
    B, in_f = x.shape
    out_f = params["w1"].shape[1]

    in_pad = _round_up(in_f, LANE)
    out_pad = _round_up(out_f, LANE)
    if block_rows is None:
        block_rows = _default_block_rows(B)
    block_rows = _round_up(block_rows, SUBLANE)
    b_pad = _round_up(B, block_rows)
    grid = b_pad // block_rows

    # Pad activations/weights to lane-dense shapes; weights in bf16 for the MXU,
    # biases / LN params stay f32 (VPU math); pad regions are zero.
    xp = _pad2(x, b_pad, in_pad, jnp.float32)
    w1 = _pad2(params["w1"], in_pad, out_pad, jnp.bfloat16)
    w2 = _pad2(params["w2"], out_pad, out_pad, jnp.bfloat16)
    ws = _pad2(params["ws"], in_pad, out_pad, jnp.bfloat16)
    b1 = _pad2(params["b1"], 1, out_pad, jnp.float32)
    g1 = _pad2(params["g1"], 1, out_pad, jnp.float32)
    be1 = _pad2(params["be1"], 1, out_pad, jnp.float32)
    b2 = _pad2(params["b2"], 1, out_pad, jnp.float32)
    g2 = _pad2(params["g2"], 1, out_pad, jnp.float32)
    be2 = _pad2(params["be2"], 1, out_pad, jnp.float32)
    bs = _pad2(params["bs"], 1, out_pad, jnp.float32)

    # Grid-invariant operands: constant index_map + single buffering (VMEM relief,
    # most important on v7x's 64 MiB VMEM).
    def inv(shape):
        return pl.BlockSpec(shape, lambda i: (0, 0), pipeline_mode=pl.Buffered(1))

    kernel = functools.partial(residual_block_kernel, out_features=out_f)

    out = pl.pallas_call(
        kernel,
        out_shape=jax.ShapeDtypeStruct((b_pad, out_pad), x.dtype),
        grid_spec=pltpu.PrefetchScalarGridSpec(
            num_scalar_prefetch=0,
            grid=(grid,),
            in_specs=[
                pl.BlockSpec((block_rows, in_pad), lambda i: (i, 0)),  # x tile
                inv((in_pad, out_pad)),    # w1 (bf16)
                inv((1, out_pad)),         # b1
                inv((1, out_pad)),         # gamma1
                inv((1, out_pad)),         # beta1
                inv((out_pad, out_pad)),   # w2 (bf16)
                inv((1, out_pad)),         # b2
                inv((1, out_pad)),         # gamma2
                inv((1, out_pad)),         # beta2
                inv((in_pad, out_pad)),    # w_shortcut (bf16)
                inv((1, out_pad)),         # b_shortcut
            ],
            out_specs=pl.BlockSpec((block_rows, out_pad), lambda i: (i, 0)),
        ),
        compiler_params=pltpu.CompilerParams(
            dimension_semantics=("parallel",),
            vmem_limit_bytes=64 * 1024 * 1024,
        ),
    )(xp, w1, b1, g1, be1, w2, b2, g2, be2, ws, bs)

    return out[:B, :out_f]


def init_params(key, in_features, out_features):
    """Deterministic PyTorch-style (uniform +-1/sqrt(fan_in)) init, f32 master copy."""
    ks = jax.random.split(key, 6)

    def lin(kw, kb, fan_in, fan_out):
        bound = 1.0 / jnp.sqrt(jnp.float32(fan_in))
        w = jax.random.uniform(kw, (fan_in, fan_out), jnp.float32, -bound, bound)
        b = jax.random.uniform(kb, (1, fan_out), jnp.float32, -bound, bound)
        return w, b

    w1, b1 = lin(ks[0], ks[1], in_features, out_features)
    w2, b2 = lin(ks[2], ks[3], out_features, out_features)
    ws, bs = lin(ks[4], ks[5], in_features, out_features)
    ones = jnp.ones((1, out_features), jnp.float32)
    zeros = jnp.zeros((1, out_features), jnp.float32)
    return dict(w1=w1, b1=b1, g1=ones, be1=zeros,
                w2=w2, b2=b2, g2=ones, be2=zeros,
                ws=ws, bs=bs)


def residual_block_ref(x, p, *, simulate_bf16=False):
    """Plain-JAX reference. simulate_bf16=True mirrors the kernel's MXU-boundary casts."""
    def cast_w(w):
        return w.astype(jnp.bfloat16).astype(jnp.float32) if simulate_bf16 else w

    def cast_a(a):
        return a.astype(jnp.bfloat16).astype(jnp.float32) if simulate_bf16 else a

    def ln(h, gamma, beta):
        mu = h.mean(-1, keepdims=True)
        var = ((h - mu) ** 2).mean(-1, keepdims=True)
        return (h - mu) * jax.lax.rsqrt(var + LN_EPS) * gamma + beta

    xr = cast_a(x)
    h = xr @ cast_w(p["w1"]) + p["b1"]
    h = jnp.maximum(ln(h, p["g1"], p["be1"]), 0.0)
    h = cast_a(h) @ cast_w(p["w2"]) + p["b2"]
    h = ln(h, p["g2"], p["be2"])
    ident = xr @ cast_w(p["ws"]) + p["bs"]
    return jnp.maximum(h + ident, 0.0)


if __name__ == "__main__":
    key = jax.random.PRNGKey(0)
    kx, kp = jax.random.split(key)

    # Small demo shapes consistent with the module; batch=16 gives a 2-step grid
    # (block_rows=8), features are zero-padded to 128 lanes inside the wrapper.
    B, in_features, out_features = 16, 16, 32
    x = jax.random.normal(kx, (B, in_features), jnp.float32)
    params = init_params(kp, in_features, out_features)

    out = jax.block_until_ready(jax.jit(residual_block)(x, params))
    assert out.shape == (B, out_features)

    # Tight check against a reference that applies the same bf16 MXU-boundary casts.
    ref_bf16 = residual_block_ref(x, params, simulate_bf16=True)
    assert jnp.allclose(out, ref_bf16, atol=1e-3, rtol=1e-3), "mismatch vs bf16-matched ref"

    # Loose check against the pure-f32 reference (bf16 weights => relaxed tolerance).
    ref_f32 = residual_block_ref(x, params, simulate_bf16=False)
    assert jnp.allclose(out, ref_f32, atol=5e-2, rtol=5e-2), "mismatch vs f32 reference"

    print("KERNEL_OK")
</pallas_src>

<mosaic_0001>
module attributes {stable_mosaic.version = 11 : i64} {
  func.func @residual_block_kernel(%arg0: i32, %arg1: memref<8x128xf32, #tpu.memory_space<vmem>>, %arg2: memref<128x128xbf16, #tpu.memory_space<vmem>>, %arg3: memref<1x128xf32, #tpu.memory_space<vmem>>, %arg4: memref<1x128xf32, #tpu.memory_space<vmem>>, %arg5: memref<1x128xf32, #tpu.memory_space<vmem>>, %arg6: memref<128x128xbf16, #tpu.memory_space<vmem>>, %arg7: memref<1x128xf32, #tpu.memory_space<vmem>>, %arg8: memref<1x128xf32, #tpu.memory_space<vmem>>, %arg9: memref<1x128xf32, #tpu.memory_space<vmem>>, %arg10: memref<128x128xbf16, #tpu.memory_space<vmem>>, %arg11: memref<1x128xf32, #tpu.memory_space<vmem>>, %arg12: memref<8x128xf32, #tpu.memory_space<vmem>>) attributes {dimension_semantics = [#tpu.dimension_semantics<parallel>], iteration_bounds = array<i64: 2>, scalar_prefetch = 0 : i64, scratch_operands = 0 : i64, tpu.core_type = #tpu.core_type<tc>, window_params = [{transform_indices = @transform_0, window_bounds = array<i64: 8, 128>}, {pipeline_mode = #tpu.pipeline_mode<synchronous>, transform_indices = @transform_1, window_bounds = array<i64: 128, 128>}, {pipeline_mode = #tpu.pipeline_mode<synchronous>, transform_indices = @transform_2, window_bounds = array<i64: 1, 128>}, {pipeline_mode = #tpu.pipeline_mode<synchronous>, transform_indices = @transform_3, window_bounds = array<i64: 1, 128>}, {pipeline_mode = #tpu.pipeline_mode<synchronous>, transform_indices = @transform_4, window_bounds = array<i64: 1, 128>}, {pipeline_mode = #tpu.pipeline_mode<synchronous>, transform_indices = @transform_5, window_bounds = array<i64: 128, 128>}, {pipeline_mode = #tpu.pipeline_mode<synchronous>, transform_indices = @transform_6, window_bounds = array<i64: 1, 128>}, {pipeline_mode = #tpu.pipeline_mode<synchronous>, transform_indices = @transform_7, window_bounds = array<i64: 1, 128>}, {pipeline_mode = #tpu.pipeline_mode<synchronous>, transform_indices = @transform_8, window_bounds = array<i64: 1, 128>}, {pipeline_mode = #tpu.pipeline_mode<synchronous>, transform_indices = @transform_9, window_bounds = array<i64: 128, 128>}, {pipeline_mode = #tpu.pipeline_mode<synchronous>, transform_indices = @transform_10, window_bounds = array<i64: 1, 128>}, {transform_indices = @transform_11, window_bounds = array<i64: 8, 128>}]} {
    %0 = tpu.iota {dimensions = array<i32: 1>} : vector<1x128xi32>
    %c32_i32 = arith.constant 32 : i32
    %1 = vector.broadcast %c32_i32 : i32 to vector<1x128xi32>
    %2 = arith.cmpi slt, %0, %1 : vector<1x128xi32>
    %c0 = arith.constant 0 : index
    %c0_0 = arith.constant 0 : index
    %3 = vector.load %arg3[%c0, %c0_0] : memref<1x128xf32, #tpu.memory_space<vmem>>, vector<1x128xf32>
    %c0_1 = arith.constant 0 : index
    %c0_2 = arith.constant 0 : index
    %4 = vector.load %arg4[%c0_1, %c0_2] : memref<1x128xf32, #tpu.memory_space<vmem>>, vector<1x128xf32>
    %c0_3 = arith.constant 0 : index
    %c0_4 = arith.constant 0 : index
    %5 = vector.load %arg5[%c0_3, %c0_4] : memref<1x128xf32, #tpu.memory_space<vmem>>, vector<1x128xf32>
    %c0_5 = arith.constant 0 : index
    %c0_6 = arith.constant 0 : index
    %6 = vector.load %arg7[%c0_5, %c0_6] : memref<1x128xf32, #tpu.memory_space<vmem>>, vector<1x128xf32>
    %c0_7 = arith.constant 0 : index
    %c0_8 = arith.constant 0 : index
    %7 = vector.load %arg8[%c0_7, %c0_8] : memref<1x128xf32, #tpu.memory_space<vmem>>, vector<1x128xf32>
    %c0_9 = arith.constant 0 : index
    %c0_10 = arith.constant 0 : index
    %8 = vector.load %arg9[%c0_9, %c0_10] : memref<1x128xf32, #tpu.memory_space<vmem>>, vector<1x128xf32>
    %c0_11 = arith.constant 0 : index
    %c0_12 = arith.constant 0 : index
    %9 = vector.load %arg11[%c0_11, %c0_12] : memref<1x128xf32, #tpu.memory_space<vmem>>, vector<1x128xf32>
    %c0_13 = arith.constant 0 : index
    %c0_14 = arith.constant 0 : index
    %10 = vector.load %arg1[%c0_13, %c0_14] : memref<8x128xf32, #tpu.memory_space<vmem>>, vector<8x128xf32>
    %11 = arith.truncf %10 : vector<8x128xf32> to vector<8x128xbf16>
    %c0_15 = arith.constant 0 : index
    %c0_16 = arith.constant 0 : index
    %12 = vector.load %arg10[%c0_15, %c0_16] : memref<128x128xbf16, #tpu.memory_space<vmem>>, vector<128x128xbf16>
    %cst = arith.constant dense<0.000000e+00> : vector<8x128xf32>
    %13 = tpu.matmul %11, %12, %cst {dimension_numbers = #tpu.dot_dimension_numbers<[1], [0], [0], [1], [0, 0, 1, 1], [], []>} : vector<8x128xbf16>, vector<128x128xbf16>, vector<8x128xf32> -> vector<8x128xf32>
    %14 = vector.broadcast %9 : vector<1x128xf32> to vector<8x128xf32>
    %15 = arith.addf %13, %14 : vector<8x128xf32>
    %c0_17 = arith.constant 0 : index
    %c0_18 = arith.constant 0 : index
    %16 = vector.load %arg2[%c0_17, %c0_18] : memref<128x128xbf16, #tpu.memory_space<vmem>>, vector<128x128xbf16>
    %cst_19 = arith.constant dense<0.000000e+00> : vector<8x128xf32>
    %17 = tpu.matmul %11, %16, %cst_19 {dimension_numbers = #tpu.dot_dimension_numbers<[1], [0], [0], [1], [0, 0, 1, 1], [], []>} : vector<8x128xbf16>, vector<128x128xbf16>, vector<8x128xf32> -> vector<8x128xf32>
    %18 = vector.broadcast %3 : vector<1x128xf32> to vector<8x128xf32>
    %19 = arith.addf %17, %18 : vector<8x128xf32>
    %cst_20 = arith.constant dense<0.000000e+00> : vector<8xf32>
    %20 = vector.multi_reduction <add>, %19, %cst_20 [1] : vector<8x128xf32> to vector<8xf32>
    %21 = vector.shape_cast %20 : vector<8xf32> to vector<8x1xf32>
    %cst_21 = arith.constant 3.125000e-02 : f32
    %22 = vector.broadcast %cst_21 : f32 to vector<8x1xf32>
    %23 = arith.mulf %21, %22 : vector<8x1xf32>
    %24 = vector.broadcast %23 : vector<8x1xf32> to vector<8x128xf32>
    %25 = arith.subf %19, %24 : vector<8x128xf32>
    %26 = arith.mulf %25, %25 : vector<8x128xf32>
    %cst_22 = arith.constant 0.000000e+00 : f32
    %27 = vector.shape_cast %2 : vector<1x128xi1> to vector<1x128xi1>
    %28 = vector.broadcast %27 : vector<1x128xi1> to vector<8x128xi1>
    %29 = vector.broadcast %cst_22 : f32 to vector<8x128xf32>
    %30 = arith.select %28, %26, %29 : vector<8x128xi1>, vector<8x128xf32>
    %cst_23 = arith.constant dense<0.000000e+00> : vector<8xf32>
    %31 = vector.multi_reduction <add>, %30, %cst_23 [1] : vector<8x128xf32> to vector<8xf32>
    %32 = vector.shape_cast %31 : vector<8xf32> to vector<8x1xf32>
    %cst_24 = arith.constant 3.125000e-02 : f32
    %33 = vector.broadcast %cst_24 : f32 to vector<8x1xf32>
    %34 = arith.mulf %32, %33 : vector<8x1xf32>
    %cst_25 = arith.constant 9.99999974E-6 : f32
    %35 = vector.broadcast %cst_25 : f32 to vector<8x1xf32>
    %36 = arith.addf %34, %35 : vector<8x1xf32>
    %37 = math.rsqrt %36 : vector<8x1xf32>
    %38 = vector.broadcast %37 : vector<8x1xf32> to vector<8x128xf32>
    %39 = arith.mulf %25, %38 : vector<8x128xf32>
    %40 = vector.broadcast %4 : vector<1x128xf32> to vector<8x128xf32>
    %41 = arith.mulf %39, %40 : vector<8x128xf32>
    %42 = vector.broadcast %5 : vector<1x128xf32> to vector<8x128xf32>
    %43 = arith.addf %41, %42 : vector<8x128xf32>
    %cst_26 = arith.constant 0.000000e+00 : f32
    %44 = vector.broadcast %cst_26 : f32 to vector<8x128xf32>
    %45 = arith.maximumf %43, %44 : vector<8x128xf32>
    %46 = arith.truncf %45 : vector<8x128xf32> to vector<8x128xbf16>
    %c0_27 = arith.constant 0 : index
    %c0_28 = arith.constant 0 : index
    %47 = vector.load %arg6[%c0_27, %c0_28] : memref<128x128xbf16, #tpu.memory_space<vmem>>, vector<128x128xbf16>
    %cst_29 = arith.constant dense<0.000000e+00> : vector<8x128xf32>
    %48 = tpu.matmul %46, %47, %cst_29 {dimension_numbers = #tpu.dot_dimension_numbers<[1], [0], [0], [1], [0, 0, 1, 1], [], []>} : vector<8x128xbf16>, vector<128x128xbf16>, vector<8x128xf32> -> vector<8x128xf32>
    %49 = vector.broadcast %6 : vector<1x128xf32> to vector<8x128xf32>
    %50 = arith.addf %48, %49 : vector<8x128xf32>
    %cst_30 = arith.constant dense<0.000000e+00> : vector<8xf32>
    %51 = vector.multi_reduction <add>, %50, %cst_30 [1] : vector<8x128xf32> to vector<8xf32>
    %52 = vector.shape_cast %51 : vector<8xf32> to vector<8x1xf32>
    %cst_31 = arith.constant 3.125000e-02 : f32
    %53 = vector.broadcast %cst_31 : f32 to vector<8x1xf32>
    %54 = arith.mulf %52, %53 : vector<8x1xf32>
    %55 = vector.broadcast %54 : vector<8x1xf32> to vector<8x128xf32>
    %56 = arith.subf %50, %55 : vector<8x128xf32>
    %57 = arith.mulf %56, %56 : vector<8x128xf32>
    %cst_32 = arith.constant 0.000000e+00 : f32
    %58 = vector.shape_cast %2 : vector<1x128xi1> to vector<1x128xi1>
    %59 = vector.broadcast %58 : vector<1x128xi1> to vector<8x128xi1>
    %60 = vector.broadcast %cst_32 : f32 to vector<8x128xf32>
    %61 = arith.select %59, %57, %60 : vector<8x128xi1>, vector<8x128xf32>
    %cst_33 = arith.constant dense<0.000000e+00> : vector<8xf32>
    %62 = vector.multi_reduction <add>, %61, %cst_33 [1] : vector<8x128xf32> to vector<8xf32>
    %63 = vector.shape_cast %62 : vector<8xf32> to vector<8x1xf32>
    %cst_34 = arith.constant 3.125000e-02 : f32
    %64 = vector.broadcast %cst_34 : f32 to vector<8x1xf32>
    %65 = arith.mulf %63, %64 : vector<8x1xf32>
    %cst_35 = arith.constant 9.99999974E-6 : f32
    %66 = vector.broadcast %cst_35 : f32 to vector<8x1xf32>
    %67 = arith.addf %65, %66 : vector<8x1xf32>
    %68 = math.rsqrt %67 : vector<8x1xf32>
    %69 = vector.broadcast %68 : vector<8x1xf32> to vector<8x128xf32>
    %70 = arith.mulf %56, %69 : vector<8x128xf32>
    %71 = vector.broadcast %7 : vector<1x128xf32> to vector<8x128xf32>
    %72 = arith.mulf %70, %71 : vector<8x128xf32>
    %73 = vector.broadcast %8 : vector<1x128xf32> to vector<8x128xf32>
    %74 = arith.addf %72, %73 : vector<8x128xf32>
    %75 = arith.addf %74, %15 : vector<8x128xf32>
    %cst_36 = arith.constant 0.000000e+00 : f32
    %76 = vector.broadcast %cst_36 : f32 to vector<8x128xf32>
    %77 = arith.maximumf %75, %76 : vector<8x128xf32>
    %c0_37 = arith.constant 0 : index
    %c0_38 = arith.constant 0 : index
    %78 = vector.load %arg12[%c0_37, %c0_38] : memref<8x128xf32, #tpu.memory_space<vmem>>, vector<8x128xf32>
    tpu.vector_store %arg12[%c0_37, %c0_38], %77 {strides = array<i32>} : memref<8x128xf32, #tpu.memory_space<vmem>>, vector<8x128xf32>,
    return
  }
  func.func @transform_0(%arg0: i32) -> (i32, i32) {
    %c0_i32 = arith.constant 0 : i32
    %c0_i32_0 = arith.constant 0 : i32
    return %arg0, %c0_i32 : i32, i32
  }
  func.func @transform_1(%arg0: i32) -> (i32, i32) {
    %c0_i32 = arith.constant 0 : i32
    %c0_i32_0 = arith.constant 0 : i32
    %c0_i32_1 = arith.constant 0 : i32
    return %c0_i32, %c0_i32_0 : i32, i32
  }
  func.func @transform_2(%arg0: i32) -> (i32, i32) {
    %c0_i32 = arith.constant 0 : i32
    %c0_i32_0 = arith.constant 0 : i32
    %c0_i32_1 = arith.constant 0 : i32
    return %c0_i32, %c0_i32_0 : i32, i32
  }
  func.func @transform_3(%arg0: i32) -> (i32, i32) {
    %c0_i32 = arith.constant 0 : i32
    %c0_i32_0 = arith.constant 0 : i32
    %c0_i32_1 = arith.constant 0 : i32
    return %c0_i32, %c0_i32_0 : i32, i32
  }
  func.func @transform_4(%arg0: i32) -> (i32, i32) {
    %c0_i32 = arith.constant 0 : i32
    %c0_i32_0 = arith.constant 0 : i32
    %c0_i32_1 = arith.constant 0 : i32
    return %c0_i32, %c0_i32_0 : i32, i32
  }
  func.func @transform_5(%arg0: i32) -> (i32, i32) {
    %c0_i32 = arith.constant 0 : i32
    %c0_i32_0 = arith.constant 0 : i32
    %c0_i32_1 = arith.constant 0 : i32
    return %c0_i32, %c0_i32_0 : i32, i32
  }
  func.func @transform_6(%arg0: i32) -> (i32, i32) {
    %c0_i32 = arith.constant 0 : i32
    %c0_i32_0 = arith.constant 0 : i32
    %c0_i32_1 = arith.constant 0 : i32
    return %c0_i32, %c0_i32_0 : i32, i32
  }
  func.func @transform_7(%arg0: i32) -> (i32, i32) {
    %c0_i32 = arith.constant 0 : i32
    %c0_i32_0 = arith.constant 0 : i32
    %c0_i32_1 = arith.constant 0 : i32
    return %c0_i32, %c0_i32_0 : i32, i32
  }
  func.func @transform_8(%arg0: i32) -> (i32, i32) {
    %c0_i32 = arith.constant 0 : i32
    %c0_i32_0 = arith.constant 0 : i32
    %c0_i32_1 = arith.constant 0 : i32
    return %c0_i32, %c0_i32_0 : i32, i32
  }
  func.func @transform_9(%arg0: i32) -> (i32, i32) {
    %c0_i32 = arith.constant 0 : i32
    %c0_i32_0 = arith.constant 0 : i32
    %c0_i32_1 = arith.constant 0 : i32
    return %c0_i32, %c0_i32_0 : i32, i32
  }
  func.func @transform_10(%arg0: i32) -> (i32, i32) {
    %c0_i32 = arith.constant 0 : i32
    %c0_i32_0 = arith.constant 0 : i32
    %c0_i32_1 = arith.constant 0 : i32
    return %c0_i32, %c0_i32_0 : i32, i32
  }
  func.func @transform_11(%arg0: i32) -> (i32, i32) {
    %c0_i32 = arith.constant 0 : i32
    %c0_i32_0 = arith.constant 0 : i32
    return %arg0, %c0_i32 : i32, i32
  }
}

</mosaic_0001>

<llo_original>
// kernel: residual_block.1
$region0: #{residual_block.1}
  #allocation0 [shape = 'u32[]', space=smem, size = 0x4, offset = 0x4, fixed_abs, tag = 'smem constant byte address 0x4 - core index']
  #allocation1 [shape = 'u32[144,128]{1,0:T(1,128)}', space=vmem, size = 0x12000, scoped, tag = 'internal scratch']
  %s0 = inlined_call_operand.vmem [shape: f32[16,128], index: 0, kind: input, shape index: {}]
  %s1 = inlined_call_operand.vmem [shape: bf16[128,128], index: 1, kind: input, shape index: {}]
  %s2 = inlined_call_operand.vmem [shape: f32[1,128], index: 2, kind: input, shape index: {}]
  %s3 = inlined_call_operand.vmem [shape: f32[1,128], index: 3, kind: input, shape index: {}]
  %s4 = inlined_call_operand.vmem [shape: f32[1,128], index: 4, kind: input, shape index: {}]
  %s5 = inlined_call_operand.vmem [shape: bf16[128,128], index: 5, kind: input, shape index: {}]
  %s6 = inlined_call_operand.vmem [shape: f32[1,128], index: 6, kind: input, shape index: {}]
  %s7 = inlined_call_operand.vmem [shape: f32[1,128], index: 7, kind: input, shape index: {}]
  %s8 = inlined_call_operand.vmem [shape: f32[1,128], index: 8, kind: input, shape index: {}]
  %s9 = inlined_call_operand.vmem [shape: bf16[128,128], index: 9, kind: input, shape index: {}]
  %s10 = inlined_call_operand.vmem [shape: f32[1,128], index: 10, kind: input, shape index: {}]
  %s11 = inlined_call_operand.hbm [shape: f32[16,128], index: 11, kind: output, shape index: {}]
  %s12 = sld [smem:[#allocation0]]
  $region77: #{residual_block.1} parent=0
    _
  %s14 = ssub.s32 1, %s12
  %s15 = scalar_select 0, %s14, %s12
  $region1: #{residual_block.1} parent=0
    #allocation2 [shape = 'u8[8192]{0}', space=vmem, size = 0x2000, scoped, tag = 'output window, operand 0']
    #allocation3 [shape = 's32[2]{0}', space=sflag, size = 0x8, scoped, tag = 'scoped memory for residual_block.1']
    %16 = vsyncpa [#allocation3], 0
    %s17 = scalar_lea.sflag [#allocation3], 1
    %18 = vsyncpa %s17, 0
    loop: start=0, step=1, limit=4
    $region2: #{residual_block.1} parent=1 // loop_pre_header
      _
    $region3: #{residual_block.1} parent=1 // loop_header
      %s20 = sphi 0, %s24
      %p21 = scmp.ge.s32.totalorder %s20, 4
      %s30 = sphi 0, %s32
      %s33 = sphi 0, %s30
      %s34 = sphi 0, %s33
      %s50 = sphi 0, %s34
      %s54 = sphi 0, %s54
      %s56 = sphi 0, %s54
      %s57 = sphi 0, %s56
      %s71 = sphi 0, %s57
      %s75 = sphi 0, %s75
      %s77 = sphi 0, %s75
      %s78 = sphi 0, %s77
      %s92 = sphi 0, %s78
      %s96 = sphi 0, %s96
      %s98 = sphi 0, %s96
      %s99 = sphi 0, %s98
      %s113 = sphi 0, %s99
      %s117 = sphi 0, %s117
      %s119 = sphi 0, %s117
      %s120 = sphi 0, %s119
      %s134 = sphi 0, %s120
      %s138 = sphi 0, %s138
      %s140 = sphi 0, %s138
      %s141 = sphi 0, %s140
      %s155 = sphi 0, %s141
      %s159 = sphi 0, %s159
      %s161 = sphi 0, %s159
      %s162 = sphi 0, %s161
      %s176 = sphi 0, %s162
      %s180 = sphi 0, %s180
      %s182 = sphi 0, %s180
      %s183 = sphi 0, %s182
      %s197 = sphi 0, %s183
      %s201 = sphi 0, %s201
      %s203 = sphi 0, %s201
      %s204 = sphi 0, %s203
      %s218 = sphi 0, %s204
      %s222 = sphi 0, %s222
      %s224 = sphi 0, %s222
      %s225 = sphi 0, %s224
      %s239 = sphi 0, %s225
      %s243 = sphi 0, %s243
      %s245 = sphi 0, %s243
      %s246 = sphi 0, %s245
      %s260 = sphi 0, %s246
      %s266 = sphi 0, %s268
      %s269 = sphi 0, %s266
      %s270 = sphi 0, %s269
      %s286 = sphi 0, %s270
    $region4: #{residual_block.1} parent=1 // loop_header_branch
      %23 = sbr.rel (%p21) target = $region8
    $region5: #{residual_block.1} parent=1 // loop_body
      %s25 = ssub.s32 %s20, 1
      %s26 = ssub.s32 %s20, 2
      %s27 = sadd.s32 %s20, 1
      %s28 = ssub.s32 %s20, %s27
      %p29 = scmp.eq.s32.totalorder %s28, 0
      %s31 = sadd.s32 %s30, 1
      %s32 = scalar_select %p29, %s30, %s31
      %p35 = pneg %p29
      %p36 = scmp.eq.s32.totalorder %s20, 1
      %p37 = por %p35, %p36
      %p38 = scmp.ne.s32.totalorder %s30, %s33
      %p39 = scmp.eq.s32.totalorder %s20, 0
      %p40 = por %p38, %p39
      %p41 = scmp.ne.s32.totalorder %s30, %s33
      %p42 = scmp.eq.s32.totalorder %s25, 1
      %p43 = por %p41, %p42
      %p44 = scmp.ne.s32.totalorder %s33, %s34
      %p45 = scmp.eq.s32.totalorder %s25, 0
      %p46 = por %p44, %p45
      %p47 = scmp.ne.s32.totalorder %s33, %s34
      %p48 = scmp.eq.s32.totalorder %s26, 1
      %p49 = por %p47, %p48
      %p51 = scmp.ne.s32.totalorder %s34, %s50
      %p52 = scmp.eq.s32.totalorder %s26, 0
      %p53 = por %p51, %p52
      %s55 = sadd.s32 %s54, 1
      %p58 = scmp.eq.s32.totalorder %s20, 1
      %p59 = scmp.ne.s32.totalorder %s54, %s56
      %p60 = scmp.eq.s32.totalorder %s20, 0
      %p61 = por %p59, %p60
      %p62 = scmp.ne.s32.totalorder %s54, %s56
      %p63 = scmp.eq.s32.totalorder %s25, 1
      %p64 = por %p62, %p63
      %p65 = scmp.ne.s32.totalorder %s56, %s57
      %p66 = scmp.eq.s32.totalorder %s25, 0
      %p67 = por %p65, %p66
      %p68 = scmp.ne.s32.totalorder %s56, %s57
      %p69 = scmp.eq.s32.totalorder %s26, 1
      %p70 = por %p68, %p69
      %p72 = scmp.ne.s32.totalorder %s57, %s71
      %p73 = scmp.eq.s32.totalorder %s26, 0
      %p74 = por %p72, %p73
      %s76 = sadd.s32 %s75, 1
      %p79 = scmp.eq.s32.totalorder %s20, 1
      %p80 = scmp.ne.s32.totalorder %s75, %s77
      %p81 = scmp.eq.s32.totalorder %s20, 0
      %p82 = por %p80, %p81
      %p83 = scmp.ne.s32.totalorder %s75, %s77
      %p84 = scmp.eq.s32.totalorder %s25, 1
      %p85 = por %p83, %p84
      %p86 = scmp.ne.s32.totalorder %s77, %s78
      %p87 = scmp.eq.s32.totalorder %s25, 0
      %p88 = por %p86, %p87
      %p89 = scmp.ne.s32.totalorder %s77, %s78
      %p90 = scmp.eq.s32.totalorder %s26, 1
      %p91 = por %p89, %p90
      %p93 = scmp.ne.s32.totalorder %s78, %s92
      %p94 = scmp.eq.s32.totalorder %s26, 0
      %p95 = por %p93, %p94
      %s97 = sadd.s32 %s96, 1
      %p100 = scmp.eq.s32.totalorder %s20, 1
      %p101 = scmp.ne.s32.totalorder %s96, %s98
      %p102 = scmp.eq.s32.totalorder %s20, 0
      %p103 = por %p101, %p102
      %p104 = scmp.ne.s32.totalorder %s96, %s98
      %p105 = scmp.eq.s32.totalorder %s25, 1
      %p106 = por %p104, %p105
      %p107 = scmp.ne.s32.totalorder %s98, %s99
      %p108 = scmp.eq.s32.totalorder %s25, 0
      %p109 = por %p107, %p108
      %p110 = scmp.ne.s32.totalorder %s98, %s99
      %p111 = scmp.eq.s32.totalorder %s26, 1
      %p112 = por %p110, %p111
      %p114 = scmp.ne.s32.totalorder %s99, %s113
      %p115 = scmp.eq.s32.totalorder %s26, 0
      %p116 = por %p114, %p115
      %s118 = sadd.s32 %s117, 1
      %p121 = scmp.eq.s32.totalorder %s20, 1
      %p122 = scmp.ne.s32.totalorder %s117, %s119
      %p123 = scmp.eq.s32.totalorder %s20, 0
      %p124 = por %p122, %p123
      %p125 = scmp.ne.s32.totalorder %s117, %s119
      %p126 = scmp.eq.s32.totalorder %s25, 1
      %p127 = por %p125, %p126
      %p128 = scmp.ne.s32.totalorder %s119, %s120
      %p129 = scmp.eq.s32.totalorder %s25, 0
      %p130 = por %p128, %p129
      %p131 = scmp.ne.s32.totalorder %s119, %s120
      %p132 = scmp.eq.s32.totalorder %s26, 1
      %p133 = por %p131, %p132
      %p135 = scmp.ne.s32.totalorder %s120, %s134
      %p136 = scmp.eq.s32.totalorder %s26, 0
      %p137 = por %p135, %p136
      %s139 = sadd.s32 %s138, 1
      %p142 = scmp.eq.s32.totalorder %s20, 1
      %p143 = scmp.ne.s32.totalorder %s138, %s140
      %p144 = scmp.eq.s32.totalorder %s20, 0
      %p145 = por %p143, %p144
      %p146 = scmp.ne.s32.totalorder %s138, %s140
      %p147 = scmp.eq.s32.totalorder %s25, 1
      %p148 = por %p146, %p147
      %p149 = scmp.ne.s32.totalorder %s140, %s141
      %p150 = scmp.eq.s32.totalorder %s25, 0
      %p151 = por %p149, %p150
      %p152 = scmp.ne.s32.totalorder %s140, %s141
      %p153 = scmp.eq.s32.totalorder %s26, 1
      %p154 = por %p152, %p153
      %p156 = scmp.ne.s32.totalorder %s141, %s155
      %p157 = scmp.eq.s32.totalorder %s26, 0
      %p158 = por %p156, %p157
      %s160 = sadd.s32 %s159, 1
      %p163 = scmp.eq.s32.totalorder %s20, 1
      %p164 = scmp.ne.s32.totalorder %s159, %s161
      %p165 = scmp.eq.s32.totalorder %s20, 0
      %p166 = por %p164, %p165
      %p167 = scmp.ne.s32.totalorder %s159, %s161
      %p168 = scmp.eq.s32.totalorder %s25, 1
      %p169 = por %p167, %p168
      %p170 = scmp.ne.s32.totalorder %s161, %s162
      %p171 = scmp.eq.s32.totalorder %s25, 0
      %p172 = por %p170, %p171
      %p173 = scmp.ne.s32.totalorder %s161, %s162
      %p174 = scmp.eq.s32.totalorder %s26, 1
      %p175 = por %p173, %p174
      %p177 = scmp.ne.s32.totalorder %s162, %s176
      %p178 = scmp.eq.s32.totalorder %s26, 0
      %p179 = por %p177, %p178
      %s181 = sadd.s32 %s180, 1
      %p184 = scmp.eq.s32.totalorder %s20, 1
      %p185 = scmp.ne.s32.totalorder %s180, %s182
      %p186 = scmp.eq.s32.totalorder %s20, 0
      %p187 = por %p185, %p186
      %p188 = scmp.ne.s32.totalorder %s180, %s182
      %p189 = scmp.eq.s32.totalorder %s25, 1
      %p190 = por %p188, %p189
      %p191 = scmp.ne.s32.totalorder %s182, %s183
      %p192 = scmp.eq.s32.totalorder %s25, 0
      %p193 = por %p191, %p192
      %p194 = scmp.ne.s32.totalorder %s182, %s183
      %p195 = scmp.eq.s32.totalorder %s26, 1
      %p196 = por %p194, %p195
      %p198 = scmp.ne.s32.totalorder %s183, %s197
      %p199 = scmp.eq.s32.totalorder %s26, 0
      %p200 = por %p198, %p199
      %s202 = sadd.s32 %s201, 1
      %p205 = scmp.eq.s32.totalorder %s20, 1
      %p206 = scmp.ne.s32.totalorder %s201, %s203
      %p207 = scmp.eq.s32.totalorder %s20, 0
      %p208 = por %p206, %p207
      %p209 = scmp.ne.s32.totalorder %s201, %s203
      %p210 = scmp.eq.s32.totalorder %s25, 1
      %p211 = por %p209, %p210
      %p212 = scmp.ne.s32.totalorder %s203, %s204
      %p213 = scmp.eq.s32.totalorder %s25, 0
      %p214 = por %p212, %p213
      %p215 = scmp.ne.s32.totalorder %s203, %s204
      %p216 = scmp.eq.s32.totalorder %s26, 1
      %p217 = por %p215, %p216
      %p219 = scmp.ne.s32.totalorder %s204, %s218
      %p220 = scmp.eq.s32.totalorder %s26, 0
      %p221 = por %p219, %p220
      %s223 = sadd.s32 %s222, 1
      %p226 = scmp.eq.s32.totalorder %s20, 1
      %p227 = scmp.ne.s32.totalorder %s222, %s224
      %p228 = scmp.eq.s32.totalorder %s20, 0
      %p229 = por %p227, %p228
      %p230 = scmp.ne.s32.totalorder %s222, %s224
      %p231 = scmp.eq.s32.totalorder %s25, 1
      %p232 = por %p230, %p231
      %p233 = scmp.ne.s32.totalorder %s224, %s225
      %p234 = scmp.eq.s32.totalorder %s25, 0
      %p235 = por %p233, %p234
      %p236 = scmp.ne.s32.totalorder %s224, %s225
      %p237 = scmp.eq.s32.totalorder %s26, 1
      %p238 = por %p236, %p237
      %p240 = scmp.ne.s32.totalorder %s225, %s239
      %p241 = scmp.eq.s32.totalorder %s26, 0
      %p242 = por %p240, %p241
      %s244 = sadd.s32 %s243, 1
      %p247 = scmp.eq.s32.totalorder %s20, 1
      %p248 = scmp.ne.s32.totalorder %s243, %s245
      %p249 = scmp.eq.s32.totalorder %s20, 0
      %p250 = por %p248, %p249
      %p251 = scmp.ne.s32.totalorder %s243, %s245
      %p252 = scmp.eq.s32.totalorder %s25, 1
      %p253 = por %p251, %p252
      %p254 = scmp.ne.s32.totalorder %s245, %s246
      %p255 = scmp.eq.s32.totalorder %s25, 0
      %p256 = por %p254, %p255
      %p257 = scmp.ne.s32.totalorder %s245, %s246
      %p258 = scmp.eq.s32.totalorder %s26, 1
      %p259 = por %p257, %p258
      %p261 = scmp.ne.s32.totalorder %s246, %s260
      %p262 = scmp.eq.s32.totalorder %s26, 0
      %p263 = por %p261, %p262
      %s264 = ssub.s32 %s20, %s27
      %p265 = scmp.eq.s32.totalorder %s264, 0
      %s267 = sadd.s32 %s266, 1
      %s268 = scalar_select %p265, %s266, %s267
      %p271 = pneg %p265
      %p272 = scmp.eq.s32.totalorder %s20, 1
      %p273 = por %p271, %p272
      %p274 = scmp.ne.s32.totalorder %s266, %s269
      %p275 = scmp.eq.s32.totalorder %s20, 0
      %p276 = por %p274, %p275
      %p277 = scmp.ne.s32.totalorder %s266, %s269
      %p278 = scmp.eq.s32.totalorder %s25, 1
      %p279 = por %p277, %p278
      %p280 = scmp.ne.s32.totalorder %s269, %s270
      %p281 = scmp.eq.s32.totalorder %s25, 0
      %p282 = por %p280, %p281
      %p283 = scmp.ne.s32.totalorder %s269, %s270
      %p284 = scmp.eq.s32.totalorder %s26, 1
      %p285 = por %p283, %p284
      %p287 = scmp.ne.s32.totalorder %s270, %s286
      %p288 = scmp.eq.s32.totalorder %s26, 0
      %p289 = por %p287, %p288
      %p290 = scmp.le.s32.totalorder 1, %s20
      %p291 = scmp.lt.s32.totalorder %s20, 3
      %p292 = pnand %p290, %p291
      %p293 = pneg %p292
      // Predicated region
      $region9: #{residual_block.1} parent=5 // pred_check
        _
      $region10: #{residual_block.1} parent=5 // pred_check_branch
        %295 = sbr.rel (%p292) target = $region12
      $region11: #{residual_block.1} parent=5 // pred_region
        %s296 = ssub.s32 %s20, 1
        // Predicated region
        $region13: #{residual_block.1} parent=11 // pred_check
          %p297 = pneg %p67
        $region14: #{residual_block.1} parent=11 // pred_check_branch
          %299 = sbr.rel (%p297) target = $region16
        $region15: #{residual_block.1} parent=11 // pred_region
          _
        $region16: #{residual_block.1} parent=11 // pred_fallthru
          _
        // Predicated region
        $region17: #{residual_block.1} parent=11 // pred_check
          %p300 = pneg %p88
        $region18: #{residual_block.1} parent=11 // pred_check_branch
          %302 = sbr.rel (%p300) target = $region20
        $region19: #{residual_block.1} parent=11 // pred_region
          _
        $region20: #{residual_block.1} parent=11 // pred_fallthru
          _
        // Predicated region
        $region21: #{residual_block.1} parent=11 // pred_check
          %p303 = pneg %p109
        $region22: #{residual_block.1} parent=11 // pred_check_branch
          %305 = sbr.rel (%p303) target = $region24
        $region23: #{residual_block.1} parent=11 // pred_region
          _
        $region24: #{residual_block.1} parent=11 // pred_fallthru
          _
        // Predicated region
        $region25: #{residual_block.1} parent=11 // pred_check
          %p306 = pneg %p130
        $region26: #{residual_block.1} parent=11 // pred_check_branch
          %308 = sbr.rel (%p306) target = $region28
        $region27: #{residual_block.1} parent=11 // pred_region
          _
        $region28: #{residual_block.1} parent=11 // pred_fallthru
          _
        // Predicated region
        $region29: #{residual_block.1} parent=11 // pred_check
          %p309 = pneg %p151
        $region30: #{residual_block.1} parent=11 // pred_check_branch
          %311 = sbr.rel (%p309) target = $region32
        $region31: #{residual_block.1} parent=11 // pred_region
          _
        $region32: #{residual_block.1} parent=11 // pred_fallthru
          _
        // Predicated region
        $region33: #{residual_block.1} parent=11 // pred_check
          %p312 = pneg %p172
        $region34: #{residual_block.1} parent=11 // pred_check_branch
          %314 = sbr.rel (%p312) target = $region36
        $region35: #{residual_block.1} parent=11 // pred_region
          _
        $region36: #{residual_block.1} parent=11 // pred_fallthru
          _
        // Predicated region
        $region37: #{residual_block.1} parent=11 // pred_check
          %p315 = pneg %p193
        $region38: #{residual_block.1} parent=11 // pred_check_branch
          %317 = sbr.rel (%p315) target = $region40
        $region39: #{residual_block.1} parent=11 // pred_region
          _
        $region40: #{residual_block.1} parent=11 // pred_fallthru
          _
        // Predicated region
        $region41: #{residual_block.1} parent=11 // pred_check
          %p318 = pneg %p214
        $region42: #{residual_block.1} parent=11 // pred_check_branch
          %320 = sbr.rel (%p318) target = $region44
        $region43: #{residual_block.1} parent=11 // pred_region
          _
        $region44: #{residual_block.1} parent=11 // pred_fallthru
          _
        // Predicated region
        $region45: #{residual_block.1} parent=11 // pred_check
          %p321 = pneg %p235
        $region46: #{residual_block.1} parent=11 // pred_check_branch
          %323 = sbr.rel (%p321) target = $region48
        $region47: #{residual_block.1} parent=11 // pred_region
          _
        $region48: #{residual_block.1} parent=11 // pred_fallthru
          _
        // Predicated region
        $region49: #{residual_block.1} parent=11 // pred_check
          %p324 = pneg %p256
        $region50: #{residual_block.1} parent=11 // pred_check_branch
          %326 = sbr.rel (%p324) target = $region52
        $region51: #{residual_block.1} parent=11 // pred_region
          _
        $region52: #{residual_block.1} parent=11 // pred_fallthru
          _
      $region12: #{residual_block.1} parent=5 // pred_fallthru
        _
      %p327 = scmp.lt.s32.totalorder %s20, 2
      // Predicated region
      $region53: #{residual_block.1} parent=5 // pred_check
        %p328 = pneg %p327
      $region54: #{residual_block.1} parent=5 // pred_check_branch
        %330 = sbr.rel (%p328) target = $region56
      $region55: #{residual_block.1} parent=5 // pred_region
        // Predicated region
        $region57: #{residual_block.1} parent=55 // pred_check
          %p331 = pneg %p40
        $region58: #{residual_block.1} parent=55 // pred_check_branch
          %333 = sbr.rel (%p331) target = $region60
        $region59: #{residual_block.1} parent=55 // pred_region
          %p334 = scmp.lt.s32.totalorder %s20, 1
          %s335 = scalar_select %p334, %s20, 1
          %s336 = smul.addr %s335, 8
          %s337 = scalar_lea.vmem %s0, %s336
        $region60: #{residual_block.1} parent=55 // pred_fallthru
          _
      $region56: #{residual_block.1} parent=5 // pred_fallthru
        _
      %p338 = scmp.le.s32.totalorder 1, %s20
      %p339 = scmp.lt.s32.totalorder %s20, 3
      %p340 = pnand %p338, %p339
      %p341 = pneg %p340
      // Predicated region
      $region61: #{residual_block.1} parent=5 // pred_check
        _
      $region62: #{residual_block.1} parent=5 // pred_check_branch
        %343 = sbr.rel (%p340) target = $region64
      $region63: #{residual_block.1} parent=5 // pred_region
        %s344 = ssub.s32 %s20, 1
        %p345 = scmp.lt.s32.totalorder %s25, 1
        %s346 = scalar_select %p345, %s25, 1
        %s347 = smul.addr %s346, 8
        %s348 = scalar_lea.vmem %s0, %s347
        %p349 = pneg %p46
        %p350 = pneg %p43
        %p351 = pneg %p67
        %p352 = pneg %p64
        %p353 = pneg %p88
        %p354 = pneg %p85
        %p355 = pneg %p109
        %p356 = pneg %p106
        %p357 = pneg %p130
        %p358 = pneg %p127
        %p359 = pneg %p151
        %p360 = pneg %p148
        %p361 = pneg %p172
        %p362 = pneg %p169
        %p363 = pneg %p193
        %p364 = pneg %p190
        %p365 = pneg %p214
        %p366 = pneg %p211
        %p367 = pneg %p235
        %p368 = pneg %p232
        %p369 = pneg %p256
        %p370 = pneg %p253
        %p371 = pneg %p282
        %p372 = pneg %p279
        %s373 = sand.u32 %s269, 1
        %s374 = scalar_lea.sflag [#allocation3], %s373
        %s375 = sand.u32 %s269, 1
        %s376 = smul.addr %s375, 8
        %s377 = scalar_lea.vmem [#allocation2], %s376
        %p378 = scmp.lt.s32.totalorder %s25, 1
        %s379 = scalar_select %p378, %s25, 1
        %s380 = smul.addr %s379, 8
        %s381 = scalar_lea.vmem %s0, %s380
        %v383 = vlaneseq
        %v384 = vand.u32 %v383, 127
        %vm385 = vcmp.lt.s32.totalorder %v384, 32
        %v386 = vld [vmem:[%s2] sm:$0x1]
        %v387 = vld [vmem:[%s3] sm:$0x1]
        %v388 = vld [vmem:[%s4] sm:$0x1]
        %v389 = vld [vmem:[%s6] sm:$0x1]
        %v390 = vld [vmem:[%s7] sm:$0x1]
        %v391 = vld [vmem:[%s8] sm:$0x1]
        %v392 = vld [vmem:[%s10] sm:$0x1]
        %v393 = vld [vmem:[%s381] sm:$0xff]
        %v394 = vpack.c.bf16 %v393, %v393
        %v395 = vld [vmem:[%s9] sm:$0xf]
        %v396 = vld [vmem:[%s9 + $0x4] sm:$0xf]
        %v397 = vld [vmem:[%s9 + $0x8] sm:$0xf]
        %v398 = vld [vmem:[%s9 + $0xc] sm:$0xf]
        %v399 = vld [vmem:[%s9 + $0x10] sm:$0xf]
        %v400 = vld [vmem:[%s9 + $0x14] sm:$0xf]
        %v401 = vld [vmem:[%s9 + $0x18] sm:$0xf]
        %v402 = vld [vmem:[%s9 + $0x1c] sm:$0xf]
        %v403 = vld [vmem:[%s9 + $0x20] sm:$0xf]
        %v404 = vld [vmem:[%s9 + $0x24] sm:$0xf]
        %v405 = vld [vmem:[%s9 + $0x28] sm:$0xf]
        %v406 = vld [vmem:[%s9 + $0x2c] sm:$0xf]
        %v407 = vld [vmem:[%s9 + $0x30] sm:$0xf]
        %v408 = vld [vmem:[%s9 + $0x34] sm:$0xf]
        %v409 = vld [vmem:[%s9 + $0x38] sm:$0xf]
        %v410 = vld [vmem:[%s9 + $0x3c] sm:$0xf]
        %v412 = vlaneseq
        %v413 = vshrl.u32 %v412, 7
        %v414 = vsub.s32 0, %v413
        %v415 = vrot.slane %v392, %v414
        %v433 = vunpack.c.l.b16 %v395
        %v434 = vunpack.c.l.b16 %v396
        %v435 = vunpack.c.l.b16 %v397
        %v436 = vunpack.c.l.b16 %v398
        %v437 = vunpack.c.l.b16 %v399
        %v438 = vunpack.c.l.b16 %v400
        %v439 = vunpack.c.l.b16 %v401
        %v440 = vunpack.c.l.b16 %v402
        %v441 = vunpack.c.l.b16 %v403
        %v442 = vunpack.c.l.b16 %v404
        %v443 = vunpack.c.l.b16 %v405
        %v444 = vunpack.c.l.b16 %v406
        %v445 = vunpack.c.l.b16 %v407
        %v446 = vunpack.c.l.b16 %v408
        %v447 = vunpack.c.l.b16 %v409
        %v448 = vunpack.c.l.b16 %v410
        %v449 = vpack.c.b16 %v434, %v433
        %v450 = vpack.c.b16 %v436, %v435
        %v451 = vpack.c.b16 %v438, %v437
        %v452 = vpack.c.b16 %v440, %v439
        %v453 = vpack.c.b16 %v442, %v441
        %v454 = vpack.c.b16 %v444, %v443
        %v455 = vpack.c.b16 %v446, %v445
        %v456 = vpack.c.b16 %v448, %v447
        %465 = vmatprep.subr.bf16.mxu0 0
        %466 = vmatpush1.bf16.msra.mxu0 %v456
        %467 = vmatprep.subr.bf16.mxu0 0
        %468 = vmatpush1.bf16.msra.mxu0 %v455
        %469 = vmatprep.subr.bf16.mxu0 0
        %470 = vmatpush1.bf16.msra.mxu0 %v454
        %471 = vmatprep.subr.bf16.mxu0 0
        %472 = vmatpush1.bf16.msra.mxu0 %v453
        %473 = vmatprep.subr.bf16.mxu0 0
        %474 = vmatpush1.bf16.msra.mxu0 %v452
        %475 = vmatprep.subr.bf16.mxu0 0
        %476 = vmatpush1.bf16.msra.mxu0 %v451
        %477 = vmatprep.subr.bf16.mxu0 0
        %478 = vmatpush1.bf16.msra.mxu0 %v450
        %479 = vmatprep.subr.bf16.mxu0 0
        %480 = vmatpush1.bf16.msra.mxu0 %v449
        %481 = vmatprep.subr.bf16.mxu0 0
        %482 = vmatpush2.bf16.msra.mxu0 0
        %483 = vmatprep.subr.bf16.mxu0 0
        %484 = vmatpush2.bf16.msra.mxu0 0
        %485 = vmatprep.subr.bf16.mxu0 0
        %486 = vmatpush2.bf16.msra.mxu0 0
        %487 = vmatprep.subr.bf16.mxu0 0
        %488 = vmatpush2.bf16.msra.mxu0 0
        %489 = vmatprep.subr.bf16.mxu0 0
        %490 = vmatpush2.bf16.msra.mxu0 0
        %491 = vmatprep.subr.bf16.mxu0 0
        %492 = vmatpush2.bf16.msra.mxu0 0
        %493 = vmatprep.subr.bf16.mxu0 0
        %494 = vmatpush2.bf16.msra.mxu0 0
        %495 = vmatprep.subr.bf16.mxu0 0
        %496 = vmatpush2.bf16.msra.mxu0 0
        %497 = vmatprep.mubr.bf16.mxu0 0
        %498 = vmatmul.mubr.bf16.gmra.mxu0 %v394
        %v499 = vpop.f32.mrf.mxu0
        %v500 = vadd.f32 %v415, %v499
        %v501 = vpop.f32.mrf.mxu0
        %v502 = vpop.f32.mrf.mxu0
        %v503 = vpop.f32.mrf.mxu0
        %504 = vdwg.mxu0
        %v505 = vld [vmem:[%s1] sm:$0xf]
        %v506 = vld [vmem:[%s1 + $0x4] sm:$0xf]
        %v507 = vld [vmem:[%s1 + $0x8] sm:$0xf]
        %v508 = vld [vmem:[%s1 + $0xc] sm:$0xf]
        %v509 = vld [vmem:[%s1 + $0x10] sm:$0xf]
        %v510 = vld [vmem:[%s1 + $0x14] sm:$0xf]
        %v511 = vld [vmem:[%s1 + $0x18] sm:$0xf]
        %v512 = vld [vmem:[%s1 + $0x1c] sm:$0xf]
        %v513 = vld [vmem:[%s1 + $0x20] sm:$0xf]
        %v514 = vld [vmem:[%s1 + $0x24] sm:$0xf]
        %v515 = vld [vmem:[%s1 + $0x28] sm:$0xf]
        %v516 = vld [vmem:[%s1 + $0x2c] sm:$0xf]
        %v517 = vld [vmem:[%s1 + $0x30] sm:$0xf]
        %v518 = vld [vmem:[%s1 + $0x34] sm:$0xf]
        %v519 = vld [vmem:[%s1 + $0x38] sm:$0xf]
        %v520 = vld [vmem:[%s1 + $0x3c] sm:$0xf]
        %v522 = vlaneseq
        %v523 = vshrl.u32 %v522, 7
        %v524 = vsub.s32 0, %v523
        %v525 = vrot.slane %v386, %v524
        %v543 = vunpack.c.l.b16 %v505
        %v544 = vunpack.c.l.b16 %v506
        %v545 = vunpack.c.l.b16 %v507
        %v546 = vunpack.c.l.b16 %v508
        %v547 = vunpack.c.l.b16 %v509
        %v548 = vunpack.c.l.b16 %v510
        %v549 = vunpack.c.l.b16 %v511
        %v550 = vunpack.c.l.b16 %v512
        %v551 = vunpack.c.l.b16 %v513
        %v552 = vunpack.c.l.b16 %v514
        %v553 = vunpack.c.l.b16 %v515
        %v554 = vunpack.c.l.b16 %v516
        %v555 = vunpack.c.l.b16 %v517
        %v556 = vunpack.c.l.b16 %v518
        %v557 = vunpack.c.l.b16 %v519
        %v558 = vunpack.c.l.b16 %v520
        %v559 = vpack.c.b16 %v544, %v543
        %v560 = vpack.c.b16 %v546, %v545
        %v561 = vpack.c.b16 %v548, %v547
        %v562 = vpack.c.b16 %v550, %v549
        %v563 = vpack.c.b16 %v552, %v551
        %v564 = vpack.c.b16 %v554, %v553
        %v565 = vpack.c.b16 %v556, %v555
        %v566 = vpack.c.b16 %v558, %v557
        %575 = vmatprep.subr.bf16.mxu0 0
        %576 = vmatpush1.bf16.msra.mxu0 %v566
        %577 = vmatprep.subr.bf16.mxu0 0
        %578 = vmatpush1.bf16.msra.mxu0 %v565
        %579 = vmatprep.subr.bf16.mxu0 0
        %580 = vmatpush1.bf16.msra.mxu0 %v564
        %581 = vmatprep.subr.bf16.mxu0 0
        %582 = vmatpush1.bf16.msra.mxu0 %v563
        %583 = vmatprep.subr.bf16.mxu0 0
        %584 = vmatpush1.bf16.msra.mxu0 %v562
        %585 = vmatprep.subr.bf16.mxu0 0
        %586 = vmatpush1.bf16.msra.mxu0 %v561
        %587 = vmatprep.subr.bf16.mxu0 0
        %588 = vmatpush1.bf16.msra.mxu0 %v560
        %589 = vmatprep.subr.bf16.mxu0 0
        %590 = vmatpush1.bf16.msra.mxu0 %v559
        %591 = vmatprep.subr.bf16.mxu0 0
        %592 = vmatpush2.bf16.msra.mxu0 0
        %593 = vmatprep.subr.bf16.mxu0 0
        %594 = vmatpush2.bf16.msra.mxu0 0
        %595 = vmatprep.subr.bf16.mxu0 0
        %596 = vmatpush2.bf16.msra.mxu0 0
        %597 = vmatprep.subr.bf16.mxu0 0
        %598 = vmatpush2.bf16.msra.mxu0 0
        %599 = vmatprep.subr.bf16.mxu0 0
        %600 = vmatpush2.bf16.msra.mxu0 0
        %601 = vmatprep.subr.bf16.mxu0 0
        %602 = vmatpush2.bf16.msra.mxu0 0
        %603 = vmatprep.subr.bf16.mxu0 0
        %604 = vmatpush2.bf16.msra.mxu0 0
        %605 = vmatprep.subr.bf16.mxu0 0
        %606 = vmatpush2.bf16.msra.mxu0 0
        %607 = vmatprep.mubr.bf16.mxu0 0
        %608 = vmatmul.mubr.bf16.gmra.mxu0 %v394
        %v609 = vpop.f32.mrf.mxu0
        %v610 = vadd.f32 %v525, %v609
        %v611 = vpop.f32.mrf.mxu0
        %v612 = vpop.f32.mrf.mxu0
        %v613 = vpop.f32.mrf.mxu0
        %614 = vdwg.mxu0
        %615 = vadd.xlane.f32.xlu0 %v610
        %v616 = vpop.xlane.xlu0 %615
        %v617 = vmul.f32 %v616, 0.03125
        %v618 = vsub.f32 %v610, %v617
        %v619 = vmul.f32 %v618, %v618
        %v620 = vsel %vm385, 1, 0
        %vm621 = vcmp.eq.s32.totalorder %v620, 1
        %v622 = vsel %vm621, %v619, 0.0
        %623 = vadd.xlane.f32.xlu0 %v622
        %v624 = vpop.xlane.xlu0 %623
        %v625 = vmul.f32 %v624, 0.03125
        %v626 = vadd.f32 %v625, 1e-05
        %v627 = vrsqrt.pop %v626
        %v628 = vmul.f32 %v618, %v627
        %v630 = vlaneseq
        %v631 = vshrl.u32 %v630, 7
        %v632 = vsub.s32 0, %v631
        %v633 = vrot.slane %v387, %v632
        %v635 = vmul.f32 %v628, %v633
        %v637 = vlaneseq
        %v638 = vshrl.u32 %v637, 7
        %v639 = vsub.s32 0, %v638
        %v640 = vrot.slane %v388, %v639
        %v642 = vadd.f32 %v635, %v640
        %v643 = vmax.f32 %v642, 0.0
        %v644 = vpack.c.bf16 %v643, %v643
        %v645 = vld [vmem:[%s5] sm:$0xf]
        %v646 = vld [vmem:[%s5 + $0x4] sm:$0xf]
        %v647 = vld [vmem:[%s5 + $0x8] sm:$0xf]
        %v648 = vld [vmem:[%s5 + $0xc] sm:$0xf]
        %v649 = vld [vmem:[%s5 + $0x10] sm:$0xf]
        %v650 = vld [vmem:[%s5 + $0x14] sm:$0xf]
        %v651 = vld [vmem:[%s5 + $0x18] sm:$0xf]
        %v652 = vld [vmem:[%s5 + $0x1c] sm:$0xf]
        %v653 = vld [vmem:[%s5 + $0x20] sm:$0xf]
        %v654 = vld [vmem:[%s5 + $0x24] sm:$0xf]
        %v655 = vld [vmem:[%s5 + $0x28] sm:$0xf]
        %v656 = vld [vmem:[%s5 + $0x2c] sm:$0xf]
        %v657 = vld [vmem:[%s5 + $0x30] sm:$0xf]
        %v658 = vld [vmem:[%s5 + $0x34] sm:$0xf]
        %v659 = vld [vmem:[%s5 + $0x38] sm:$0xf]
        %v660 = vld [vmem:[%s5 + $0x3c] sm:$0xf]
        %v662 = vlaneseq
        %v663 = vshrl.u32 %v662, 7
        %v664 = vsub.s32 0, %v663
        %v665 = vrot.slane %v389, %v664
        %v683 = vunpack.c.l.b16 %v645
        %v684 = vunpack.c.l.b16 %v646
        %v685 = vunpack.c.l.b16 %v647
        %v686 = vunpack.c.l.b16 %v648
        %v687 = vunpack.c.l.b16 %v649
        %v688 = vunpack.c.l.b16 %v650
        %v689 = vunpack.c.l.b16 %v651
        %v690 = vunpack.c.l.b16 %v652
        %v691 = vunpack.c.l.b16 %v653
        %v692 = vunpack.c.l.b16 %v654
        %v693 = vunpack.c.l.b16 %v655
        %v694 = vunpack.c.l.b16 %v656
        %v695 = vunpack.c.l.b16 %v657
        %v696 = vunpack.c.l.b16 %v658
        %v697 = vunpack.c.l.b16 %v659
        %v698 = vunpack.c.l.b16 %v660
        %v699 = vpack.c.b16 %v684, %v683
        %v700 = vpack.c.b16 %v686, %v685
        %v701 = vpack.c.b16 %v688, %v687
        %v702 = vpack.c.b16 %v690, %v689
        %v703 = vpack.c.b16 %v692, %v691
        %v704 = vpack.c.b16 %v694, %v693
        %v705 = vpack.c.b16 %v696, %v695
        %v706 = vpack.c.b16 %v698, %v697
        %715 = vmatprep.subr.bf16.mxu0 0
        %716 = vmatpush1.bf16.msra.mxu0 %v706
        %717 = vmatprep.subr.bf16.mxu0 0
        %718 = vmatpush1.bf16.msra.mxu0 %v705
        %719 = vmatprep.subr.bf16.mxu0 0
        %720 = vmatpush1.bf16.msra.mxu0 %v704
        %721 = vmatprep.subr.bf16.mxu0 0
        %722 = vmatpush1.bf16.msra.mxu0 %v703
        %723 = vmatprep.subr.bf16.mxu0 0
        %724 = vmatpush1.bf16.msra.mxu0 %v702
        %725 = vmatprep.subr.bf16.mxu0 0
        %726 = vmatpush1.bf16.msra.mxu0 %v701
        %727 = vmatprep.subr.bf16.mxu0 0
        %728 = vmatpush1.bf16.msra.mxu0 %v700
        %729 = vmatprep.subr.bf16.mxu0 0
        %730 = vmatpush1.bf16.msra.mxu0 %v699
        %731 = vmatprep.subr.bf16.mxu0 0
        %732 = vmatpush2.bf16.msra.mxu0 0
        %733 = vmatprep.subr.bf16.mxu0 0
        %734 = vmatpush2.bf16.msra.mxu0 0
        %735 = vmatprep.subr.bf16.mxu0 0
        %736 = vmatpush2.bf16.msra.mxu0 0
        %737 = vmatprep.subr.bf16.mxu0 0
        %738 = vmatpush2.bf16.msra.mxu0 0
        %739 = vmatprep.subr.bf16.mxu0 0
        %740 = vmatpush2.bf16.msra.mxu0 0
        %741 = vmatprep.subr.bf16.mxu0 0
        %742 = vmatpush2.bf16.msra.mxu0 0
        %743 = vmatprep.subr.bf16.mxu0 0
        %744 = vmatpush2.bf16.msra.mxu0 0
        %745 = vmatprep.subr.bf16.mxu0 0
        %746 = vmatpush2.bf16.msra.mxu0 0
        %747 = vmatprep.mubr.bf16.mxu0 0
        %748 = vmatmul.mubr.bf16.gmra.mxu0 %v644
        %v749 = vpop.f32.mrf.mxu0
        %v750 = vadd.f32 %v665, %v749
        %v751 = vpop.f32.mrf.mxu0
        %v752 = vpop.f32.mrf.mxu0
        %v753 = vpop.f32.mrf.mxu0
        %754 = vdwg.mxu0
        %755 = vadd.xlane.f32.xlu0 %v750
        %v756 = vpop.xlane.xlu0 %755
        %v757 = vmul.f32 %v756, 0.03125
        %v758 = vsub.f32 %v750, %v757
        %v759 = vmul.f32 %v758, %v758
        %v760 = vsel %vm621, %v759, 0.0
        %761 = vadd.xlane.f32.xlu0 %v760
        %v762 = vpop.xlane.xlu0 %761
        %v763 = vmul.f32 %v762, 0.03125
        %v764 = vadd.f32 %v763, 1e-05
        %v765 = vrsqrt.pop %v764
        %v766 = vmul.f32 %v758, %v765
        %v768 = vlaneseq
        %v769 = vshrl.u32 %v768, 7
        %v770 = vsub.s32 0, %v769
        %v771 = vrot.slane %v390, %v770
        %v773 = vmul.f32 %v766, %v771
        %v775 = vlaneseq
        %v776 = vshrl.u32 %v775, 7
        %v777 = vsub.s32 0, %v776
        %v778 = vrot.slane %v391, %v777
        %v780 = vadd.f32 %v773, %v778
        %v781 = vadd.f32 %v780, %v500
        %v782 = vmax.f32 %v781, 0.0
        %783 = vst [vmem:[%s377] sm:$0xff] %v782
        %s784 = sand.u32 %s269, 1
        %s785 = scalar_lea.sflag [#allocation3], %s784
        %s786 = sand.u32 %s269, 1
        %s787 = smul.addr %s786, 8
        %s788 = scalar_lea.vmem [#allocation2], %s787
        // Predicated region
        $region65: #{residual_block.1} parent=63 // pred_check
          %p789 = pneg %p279
        $region66: #{residual_block.1} parent=63 // pred_check_branch
          %791 = sbr.rel (%p789) target = $region68
        $region67: #{residual_block.1} parent=63 // pred_region
          %s793 = ssub.s32 128, 128
          %794 = vsyncadd %s785, %s793
          %s795 = smul.addr %s25, 128
          %s796 = scalar_lea.hbm %s11, %s795
          %s798 = sshll.u32 %s788, 4
          %s799 = int_to_ptr.vmem [resolvable:$true] %s798
          %801 = dma.vmem_to_hbm [thread:$0]  %s799, 128, %s796, %s785
        $region68: #{residual_block.1} parent=63 // pred_fallthru
          _
      $region64: #{residual_block.1} parent=5 // pred_fallthru
        _
      %p802 = scmp.le.s32.totalorder 2, %s20
      // Predicated region
      $region69: #{residual_block.1} parent=5 // pred_check
        %p803 = pneg %p802
      $region70: #{residual_block.1} parent=5 // pred_check_branch
        %805 = sbr.rel (%p803) target = $region72
      $region71: #{residual_block.1} parent=5 // pred_region
        %s806 = ssub.s32 %s20, 2
        // Predicated region
        $region73: #{residual_block.1} parent=71 // pred_check
          %p807 = pneg %p285
        $region74: #{residual_block.1} parent=71 // pred_check_branch
          %809 = sbr.rel (%p807) target = $region76
        $region75: #{residual_block.1} parent=71 // pred_region
          %s810 = sand.u32 %s270, 1
          %s811 = scalar_lea.sflag [#allocation3], %s810
          %s812 = sand.u32 %s270, 1
          %s813 = smul.addr %s812, 8
          %s814 = scalar_lea.vmem [#allocation2], %s813
          %815 = dma.done %s811, 128
        $region76: #{residual_block.1} parent=71 // pred_fallthru
          _
      $region72: #{residual_block.1} parent=5 // pred_fallthru
        _
    $region6: #{residual_block.1} parent=1 // loop_footer
      %s24 = sadd.s32 1, %s20
    $region7: #{residual_block.1} parent=1 // loop_footer_branch
      %19 = sbr.rel target = $region3
    $region8: #{residual_block.1} parent=1 // loop_exit
      _
    %816 = vsyncpa [#allocation3], 1
    %s817 = scalar_lea.sflag [#allocation3], 1
    %818 = vsyncpa %s817, 1

</llo_original>
